<compile_context>
chip_gen: v7x
topology: tpu7x:2x2x1
jax: 0.10.0
libtpu: 0.0.40
codegen_flags: <defaults>
</compile_context>

<pallas_src>
import math

import jax
import jax.numpy as jnp
from jax.experimental import pallas as pl
from jax.experimental.pallas import tpu as pltpu

IN_DIM = 8 + 4     # state(8) + action(4)
HID = 64
OUT_DIM = 8 + 1    # next state(8) + reward(1)


def _round_up(n, m):
    return ((n + m - 1) // m) * m


def _mlp_kernel(x_ref, w1_ref, b1_ref, w2_ref, b2_ref, w3_ref, b3_ref, o_ref):
    # Feature-major: x_ref is (IN_DIM, tb), weights are (out, in), biases (out, 1).
    # Matmul inputs are cast to the weight dtype (bf16 by default); MXU accumulates
    # in f32 via preferred_element_type, elementwise math stays f32.
    x = x_ref[...].astype(w1_ref.dtype)                                  # (12, tb)
    h1 = jnp.dot(w1_ref[...], x, preferred_element_type=jnp.float32)    # (64, tb)
    h1 = jnp.maximum(h1 + b1_ref[...], 0.0)
    h2 = jnp.dot(w2_ref[...], h1.astype(w2_ref.dtype),
                 preferred_element_type=jnp.float32)                     # (64, tb)
    h2 = jnp.maximum(h2 + b2_ref[...], 0.0)
    out = jnp.dot(w3_ref[...], h2.astype(w3_ref.dtype),
                  preferred_element_type=jnp.float32) + b3_ref[...]      # (9, tb)
    o_ref[...] = out.astype(o_ref.dtype)


def lunar_lander_world_model(x, params, *, batch_tile=1024,
                             matmul_dtype=jnp.bfloat16):
    """x: (B, 12) float32 -> (B, 9) float32.

    params = (w1, b1, w2, b2, w3, b3) with w_i of shape (out, in) (PyTorch layout)
    and b_i of shape (out, 1), all float32.
    """
    B, F = x.shape
    assert F == IN_DIM
    assert batch_tile % 128 == 0, "batch_tile must be a multiple of 128 (lane dim)"
    w1, b1, w2, b2, w3, b3 = params

    # Tile the batch; pad it up so every grid step is a full, lane-dense tile.
    tb = min(batch_tile, _round_up(B, 128))
    B_pad = _round_up(B, tb)
    grid = (B_pad // tb,)

    # Feature-major layout: (IN_DIM, B_pad) with batch on the lane dimension.
    xt = jnp.pad(x, ((0, B_pad - B), (0, 0))).T

    # Low-precision matmul inputs (f32 accumulation inside the kernel).
    w1c = w1.astype(matmul_dtype)
    w2c = w2.astype(matmul_dtype)
    w3c = w3.astype(matmul_dtype)

    w_itemsize = jnp.dtype(matmul_dtype).itemsize
    flops = 2 * B_pad * (IN_DIM * HID + HID * HID + HID * OUT_DIM)
    bytes_accessed = (B_pad * (IN_DIM + OUT_DIM) * 4
                      + (w1c.size + w2c.size + w3c.size) * w_itemsize
                      + (b1.size + b2.size + b3.size) * 4)

    out_t = pl.pallas_call(
        _mlp_kernel,
        out_shape=jax.ShapeDtypeStruct((OUT_DIM, B_pad), jnp.float32),
        grid_spec=pltpu.PrefetchScalarGridSpec(
            num_scalar_prefetch=0,
            grid=grid,
            in_specs=[
                # Activations: batch tiled along lanes.
                pl.BlockSpec((IN_DIM, tb), lambda i: (0, i)),
                # Weights / biases: full-array blocks, constant index -> resident.
                pl.BlockSpec((HID, IN_DIM), lambda i: (0, 0)),
                pl.BlockSpec((HID, 1), lambda i: (0, 0)),
                pl.BlockSpec((HID, HID), lambda i: (0, 0)),
                pl.BlockSpec((HID, 1), lambda i: (0, 0)),
                pl.BlockSpec((OUT_DIM, HID), lambda i: (0, 0)),
                pl.BlockSpec((OUT_DIM, 1), lambda i: (0, 0)),
            ],
            out_specs=pl.BlockSpec((OUT_DIM, tb), lambda i: (0, i)),
        ),
        compiler_params=pltpu.CompilerParams(
            dimension_semantics=("parallel",)),
        cost_estimate=pl.CostEstimate(flops=flops, transcendentals=0,
                                      bytes_accessed=bytes_accessed),
    )(xt, w1c, b1, w2c, b2, w3c, b3)

    # Back to the PyTorch-facing (batch, feature) layout; drop pad rows.
    return out_t[:, :B].T


def init_params(key):
    """PyTorch nn.Linear default init (uniform +/- 1/sqrt(fan_in)), weight (out, in)."""
    def linear(key, fan_in, fan_out):
        kw, kb = jax.random.split(key)
        bound = 1.0 / math.sqrt(fan_in)
        w = jax.random.uniform(kw, (fan_out, fan_in), jnp.float32, -bound, bound)
        b = jax.random.uniform(kb, (fan_out, 1), jnp.float32, -bound, bound)
        return w, b

    k1, k2, k3 = jax.random.split(key, 3)
    w1, b1 = linear(k1, IN_DIM, HID)
    w2, b2 = linear(k2, HID, HID)
    w3, b3 = linear(k3, HID, OUT_DIM)
    return (w1, b1, w2, b2, w3, b3)


def reference_forward(x, params, matmul_dtype=jnp.float32):
    """Pure-JAX reference (optionally with the same bf16 matmul-input casts)."""
    w1, b1, w2, b2, w3, b3 = params
    c = lambda a: a.astype(matmul_dtype)
    dot = lambda a, b: jnp.dot(a, b, preferred_element_type=jnp.float32,
                               precision=jax.lax.Precision.HIGHEST)
    xt = x.T
    h1 = jnp.maximum(dot(c(w1), c(xt)) + b1, 0.0)
    h2 = jnp.maximum(dot(c(w2), c(h1)) + b2, 0.0)
    out = dot(c(w3), c(h2)) + b3
    return out.T


if __name__ == "__main__":
    key = jax.random.PRNGKey(0)
    kx, kp = jax.random.split(key)
    params = init_params(kp)

    # Small test batch (consistent with the 12-feature module).
    B = 8
    x = jax.random.normal(kx, (B, IN_DIM), jnp.float32)

    # Default (bf16 matmul inputs, f32 accumulation) path.
    out = jax.block_until_ready(lunar_lander_world_model(x, params))
    assert out.shape == (B, OUT_DIM)
    ref_matched = reference_forward(x, params, matmul_dtype=jnp.bfloat16)
    assert jnp.allclose(out, ref_matched, atol=1e-4, rtol=1e-4), \
        "mismatch vs bf16-matched reference"
    ref_f32 = reference_forward(x, params, matmul_dtype=jnp.float32)
    assert jnp.allclose(out, ref_f32, atol=5e-2, rtol=5e-2), \
        "bf16 path too far from f32 reference"

    # f32 path + multi-step grid + non-multiple-of-tile batch (pad/slice handling).
    B2 = 1000
    x2 = jax.random.normal(kx, (B2, IN_DIM), jnp.float32)
    out2 = jax.block_until_ready(
        lunar_lander_world_model(x2, params, batch_tile=256,
                                 matmul_dtype=jnp.float32))
    assert out2.shape == (B2, OUT_DIM)
    ref2 = reference_forward(x2, params, matmul_dtype=jnp.float32)
    assert jnp.allclose(out2, ref2, atol=1e-4, rtol=1e-4), \
        "mismatch vs f32 reference"

    print("KERNEL_OK")
</pallas_src>

<mosaic_0001>
module attributes {stable_mosaic.version = 11 : i64} {
  func.func @_mlp_kernel(%arg0: i32, %arg1: memref<12x128xf32, #tpu.memory_space<vmem>>, %arg2: memref<64x12xbf16, #tpu.memory_space<vmem>>, %arg3: memref<64x1xf32, #tpu.memory_space<vmem>>, %arg4: memref<64x64xbf16, #tpu.memory_space<vmem>>, %arg5: memref<64x1xf32, #tpu.memory_space<vmem>>, %arg6: memref<9x64xbf16, #tpu.memory_space<vmem>>, %arg7: memref<9x1xf32, #tpu.memory_space<vmem>>, %arg8: memref<9x128xf32, #tpu.memory_space<vmem>>) attributes {dimension_semantics = [#tpu.dimension_semantics<parallel>], iteration_bounds = array<i64: 1>, scalar_prefetch = 0 : i64, scratch_operands = 0 : i64, tpu.core_type = #tpu.core_type<tc>, window_params = [{transform_indices = @transform_0, window_bounds = array<i64: 12, 128>}, {pipeline_mode = #tpu.pipeline_mode<synchronous>, transform_indices = @transform_1, window_bounds = array<i64: 64, 12>}, {pipeline_mode = #tpu.pipeline_mode<synchronous>, transform_indices = @transform_2, window_bounds = array<i64: 64, 1>}, {pipeline_mode = #tpu.pipeline_mode<synchronous>, transform_indices = @transform_3, window_bounds = array<i64: 64, 64>}, {pipeline_mode = #tpu.pipeline_mode<synchronous>, transform_indices = @transform_4, window_bounds = array<i64: 64, 1>}, {pipeline_mode = #tpu.pipeline_mode<synchronous>, transform_indices = @transform_5, window_bounds = array<i64: 9, 64>}, {pipeline_mode = #tpu.pipeline_mode<synchronous>, transform_indices = @transform_6, window_bounds = array<i64: 9, 1>}, {transform_indices = @transform_7, window_bounds = array<i64: 9, 128>}]} {
    %c0 = arith.constant 0 : index
    %c0_0 = arith.constant 0 : index
    %0 = vector.load %arg1[%c0, %c0_0] : memref<12x128xf32, #tpu.memory_space<vmem>>, vector<12x128xf32>
    %1 = arith.truncf %0 : vector<12x128xf32> to vector<12x128xbf16>
    %c0_1 = arith.constant 0 : index
    %c0_2 = arith.constant 0 : index
    %2 = vector.load %arg2[%c0_1, %c0_2] : memref<64x12xbf16, #tpu.memory_space<vmem>>, vector<64x12xbf16>
    %cst = arith.constant dense<0.000000e+00> : vector<64x128xf32>
    %3 = tpu.matmul %2, %1, %cst {dimension_numbers = #tpu.dot_dimension_numbers<[1], [0], [0], [1], [0, 0, 1, 1], [], []>} : vector<64x12xbf16>, vector<12x128xbf16>, vector<64x128xf32> -> vector<64x128xf32>
    %c0_3 = arith.constant 0 : index
    %c0_4 = arith.constant 0 : index
    %4 = vector.load %arg3[%c0_3, %c0_4] : memref<64x1xf32, #tpu.memory_space<vmem>>, vector<64x1xf32>
    %5 = vector.broadcast %4 : vector<64x1xf32> to vector<64x128xf32>
    %6 = arith.addf %3, %5 : vector<64x128xf32>
    %cst_5 = arith.constant 0.000000e+00 : f32
    %7 = vector.broadcast %cst_5 : f32 to vector<64x128xf32>
    %8 = arith.maximumf %6, %7 : vector<64x128xf32>
    %c0_6 = arith.constant 0 : index
    %c0_7 = arith.constant 0 : index
    %9 = vector.load %arg4[%c0_6, %c0_7] : memref<64x64xbf16, #tpu.memory_space<vmem>>, vector<64x64xbf16>
    %10 = arith.truncf %8 : vector<64x128xf32> to vector<64x128xbf16>
    %cst_8 = arith.constant dense<0.000000e+00> : vector<64x128xf32>
    %11 = tpu.matmul %9, %10, %cst_8 {dimension_numbers = #tpu.dot_dimension_numbers<[1], [0], [0], [1], [0, 0, 1, 1], [], []>} : vector<64x64xbf16>, vector<64x128xbf16>, vector<64x128xf32> -> vector<64x128xf32>
    %c0_9 = arith.constant 0 : index
    %c0_10 = arith.constant 0 : index
    %12 = vector.load %arg5[%c0_9, %c0_10] : memref<64x1xf32, #tpu.memory_space<vmem>>, vector<64x1xf32>
    %13 = vector.broadcast %12 : vector<64x1xf32> to vector<64x128xf32>
    %14 = arith.addf %11, %13 : vector<64x128xf32>
    %cst_11 = arith.constant 0.000000e+00 : f32
    %15 = vector.broadcast %cst_11 : f32 to vector<64x128xf32>
    %16 = arith.maximumf %14, %15 : vector<64x128xf32>
    %c0_12 = arith.constant 0 : index
    %c0_13 = arith.constant 0 : index
    %17 = vector.load %arg6[%c0_12, %c0_13] : memref<9x64xbf16, #tpu.memory_space<vmem>>, vector<9x64xbf16>
    %18 = arith.truncf %16 : vector<64x128xf32> to vector<64x128xbf16>
    %cst_14 = arith.constant dense<0.000000e+00> : vector<9x128xf32>
    %19 = tpu.matmul %17, %18, %cst_14 {dimension_numbers = #tpu.dot_dimension_numbers<[1], [0], [0], [1], [0, 0, 1, 1], [], []>} : vector<9x64xbf16>, vector<64x128xbf16>, vector<9x128xf32> -> vector<9x128xf32>
    %c0_15 = arith.constant 0 : index
    %c0_16 = arith.constant 0 : index
    %20 = vector.load %arg7[%c0_15, %c0_16] : memref<9x1xf32, #tpu.memory_space<vmem>>, vector<9x1xf32>
    %21 = vector.broadcast %20 : vector<9x1xf32> to vector<9x128xf32>
    %22 = arith.addf %19, %21 : vector<9x128xf32>
    %c0_17 = arith.constant 0 : index
    %c0_18 = arith.constant 0 : index
    %23 = vector.load %arg8[%c0_17, %c0_18] : memref<9x128xf32, #tpu.memory_space<vmem>>, vector<9x128xf32>
    tpu.vector_store %arg8[%c0_17, %c0_18], %22 {strides = array<i32>} : memref<9x128xf32, #tpu.memory_space<vmem>>, vector<9x128xf32>,
    return
  }
  func.func @transform_0(%arg0: i32) -> (i32, i32) {
    %c0_i32 = arith.constant 0 : i32
    %c0_i32_0 = arith.constant 0 : i32
    return %c0_i32, %arg0 : i32, i32
  }
  func.func @transform_1(%arg0: i32) -> (i32, i32) {
    %c0_i32 = arith.constant 0 : i32
    %c0_i32_0 = arith.constant 0 : i32
    %c0_i32_1 = arith.constant 0 : i32
    return %c0_i32, %c0_i32_0 : i32, i32
  }
  func.func @transform_2(%arg0: i32) -> (i32, i32) {
    %c0_i32 = arith.constant 0 : i32
    %c0_i32_0 = arith.constant 0 : i32
    %c0_i32_1 = arith.constant 0 : i32
    return %c0_i32, %c0_i32_0 : i32, i32
  }
  func.func @transform_3(%arg0: i32) -> (i32, i32) {
    %c0_i32 = arith.constant 0 : i32
    %c0_i32_0 = arith.constant 0 : i32
    %c0_i32_1 = arith.constant 0 : i32
    return %c0_i32, %c0_i32_0 : i32, i32
  }
  func.func @transform_4(%arg0: i32) -> (i32, i32) {
    %c0_i32 = arith.constant 0 : i32
    %c0_i32_0 = arith.constant 0 : i32
    %c0_i32_1 = arith.constant 0 : i32
    return %c0_i32, %c0_i32_0 : i32, i32
  }
  func.func @transform_5(%arg0: i32) -> (i32, i32) {
    %c0_i32 = arith.constant 0 : i32
    %c0_i32_0 = arith.constant 0 : i32
    %c0_i32_1 = arith.constant 0 : i32
    return %c0_i32, %c0_i32_0 : i32, i32
  }
  func.func @transform_6(%arg0: i32) -> (i32, i32) {
    %c0_i32 = arith.constant 0 : i32
    %c0_i32_0 = arith.constant 0 : i32
    %c0_i32_1 = arith.constant 0 : i32
    return %c0_i32, %c0_i32_0 : i32, i32
  }
  func.func @transform_7(%arg0: i32) -> (i32, i32) {
    %c0_i32 = arith.constant 0 : i32
    %c0_i32_0 = arith.constant 0 : i32
    return %c0_i32, %arg0 : i32, i32
  }
}

</mosaic_0001>

<llo_original>
// kernel: tpu_custom_call.1
$region0: #{tpu_custom_call.1}
  #allocation0 [shape = 'u32[]', space=smem, size = 0x4, offset = 0x4, fixed_abs, tag = 'smem constant byte address 0x4 - core index']
  #allocation1 [shape = 'u32[144,128]{1,0:T(1,128)}', space=vmem, size = 0x12000, scoped, tag = 'internal scratch']
  %s0 = inlined_call_operand.vmem [shape: f32[12,128], index: 0, kind: input, shape index: {}]
  %s1 = inlined_call_operand.vmem [shape: bf16[64,12], index: 1, kind: input, shape index: {}]
  %s2 = inlined_call_operand.vmem [shape: f32[64,1], index: 2, kind: input, shape index: {}]
  %s3 = inlined_call_operand.vmem [shape: bf16[64,64], index: 3, kind: input, shape index: {}]
  %s4 = inlined_call_operand.vmem [shape: f32[64,1], index: 4, kind: input, shape index: {}]
  %s5 = inlined_call_operand.vmem [shape: bf16[9,64], index: 5, kind: input, shape index: {}]
  %s6 = inlined_call_operand.vmem [shape: f32[9,1], index: 6, kind: input, shape index: {}]
  %s7 = inlined_call_operand.hbm [shape: f32[9,128], index: 7, kind: output, shape index: {}]
  %s8 = sld [smem:[#allocation0]]
  $region38: #{tpu_custom_call.1} parent=0
    _
  %s10 = ssub.s32 1, %s8
  %s11 = scalar_select 0, %s10, %s8
  $region1: #{tpu_custom_call.1} parent=0
    #allocation2 [shape = 'u8[8192]{0}', space=vmem, size = 0x2000, scoped, tag = 'output window, operand 0, single buffered']
    #allocation3 [shape = 's32[1]{0}', space=sflag, size = 0x4, scoped, tag = 'scoped memory for tpu_custom_call.1']
    %12 = vsyncpa [#allocation3], 0
    // Predicated region
    $region2: #{tpu_custom_call.1} parent=1 // pred_check
      _
    $region3: #{tpu_custom_call.1} parent=1 // pred_check_branch
      %14 = sbr.rel (0) target = $region5
    $region4: #{tpu_custom_call.1} parent=1 // pred_region
      _
    $region5: #{tpu_custom_call.1} parent=1 // pred_fallthru
      _
    // Predicated region
    $region6: #{tpu_custom_call.1} parent=1 // pred_check
      _
    $region7: #{tpu_custom_call.1} parent=1 // pred_check_branch
      %16 = sbr.rel (0) target = $region9
    $region8: #{tpu_custom_call.1} parent=1 // pred_region
      _
    $region9: #{tpu_custom_call.1} parent=1 // pred_fallthru
      _
    // Predicated region
    $region10: #{tpu_custom_call.1} parent=1 // pred_check
      _
    $region11: #{tpu_custom_call.1} parent=1 // pred_check_branch
      %18 = sbr.rel (0) target = $region13
    $region12: #{tpu_custom_call.1} parent=1 // pred_region
      _
    $region13: #{tpu_custom_call.1} parent=1 // pred_fallthru
      _
    // Predicated region
    $region14: #{tpu_custom_call.1} parent=1 // pred_check
      _
    $region15: #{tpu_custom_call.1} parent=1 // pred_check_branch
      %20 = sbr.rel (0) target = $region17
    $region16: #{tpu_custom_call.1} parent=1 // pred_region
      _
    $region17: #{tpu_custom_call.1} parent=1 // pred_fallthru
      _
    // Predicated region
    $region18: #{tpu_custom_call.1} parent=1 // pred_check
      _
    $region19: #{tpu_custom_call.1} parent=1 // pred_check_branch
      %22 = sbr.rel (0) target = $region21
    $region20: #{tpu_custom_call.1} parent=1 // pred_region
      _
    $region21: #{tpu_custom_call.1} parent=1 // pred_fallthru
      _
    // Predicated region
    $region22: #{tpu_custom_call.1} parent=1 // pred_check
      _
    $region23: #{tpu_custom_call.1} parent=1 // pred_check_branch
      %24 = sbr.rel (0) target = $region25
    $region24: #{tpu_custom_call.1} parent=1 // pred_region
      _
    $region25: #{tpu_custom_call.1} parent=1 // pred_fallthru
      _
    // Predicated region
    $region26: #{tpu_custom_call.1} parent=1 // pred_check
      _
    $region27: #{tpu_custom_call.1} parent=1 // pred_check_branch
      %26 = sbr.rel (0) target = $region29
    $region28: #{tpu_custom_call.1} parent=1 // pred_region
      _
    $region29: #{tpu_custom_call.1} parent=1 // pred_fallthru
      _
    %v28 = vld [vmem:[%s0] sm:$0xff]
    %v29 = vld [vmem:[%s0 + $0x8] sm:$0xf]
    %v30 = vpack.c.bf16 %v29, %v28
    %v31 = vld [vmem:[%s1] sm:$0xf]
    %v32 = vld [vmem:[%s1 + $0x4] sm:$0xf]
    %v33 = vld [vmem:[%s1 + $0x8] sm:$0xf]
    %v34 = vld [vmem:[%s1 + $0xc] sm:$0xf]
    %v35 = vld [vmem:[%s1 + $0x10] sm:$0xf]
    %v36 = vld [vmem:[%s1 + $0x14] sm:$0xf]
    %v37 = vld [vmem:[%s1 + $0x18] sm:$0xf]
    %v38 = vld [vmem:[%s1 + $0x1c] sm:$0xf]
    %v39 = vld [vmem:[%s2] sm:$0xff]
    %v40 = vld [vmem:[%s2 + $0x8] sm:$0xff]
    %v41 = vld [vmem:[%s2 + $0x10] sm:$0xff]
    %v42 = vld [vmem:[%s2 + $0x18] sm:$0xff]
    %v43 = vld [vmem:[%s2 + $0x20] sm:$0xff]
    %v44 = vld [vmem:[%s2 + $0x28] sm:$0xff]
    %v45 = vld [vmem:[%s2 + $0x30] sm:$0xff]
    %v46 = vld [vmem:[%s2 + $0x38] sm:$0xff]
    %48 = vset.pattern.permute.xlu0 0
    %49 = vperm.xlu0 %48, %v39
    %v50 = vpop.permute.xlu0 %49
    %53 = vset.pattern.permute.xlu0 0
    %54 = vperm.xlu0 %53, %v40
    %v55 = vpop.permute.xlu0 %54
    %58 = vset.pattern.permute.xlu0 0
    %59 = vperm.xlu0 %58, %v41
    %v60 = vpop.permute.xlu0 %59
    %63 = vset.pattern.permute.xlu0 0
    %64 = vperm.xlu0 %63, %v42
    %v65 = vpop.permute.xlu0 %64
    %68 = vset.pattern.permute.xlu0 0
    %69 = vperm.xlu0 %68, %v43
    %v70 = vpop.permute.xlu0 %69
    %73 = vset.pattern.permute.xlu0 0
    %74 = vperm.xlu0 %73, %v44
    %v75 = vpop.permute.xlu0 %74
    %78 = vset.pattern.permute.xlu0 0
    %79 = vperm.xlu0 %78, %v45
    %v80 = vpop.permute.xlu0 %79
    %83 = vset.pattern.permute.xlu0 0
    %84 = vperm.xlu0 %83, %v46
    %v85 = vpop.permute.xlu0 %84
    %v95 = vunpack.c.l.b16 %v31
    %v96 = vunpack.c.l.b16 %v32
    %v97 = vunpack.c.l.b16 %v33
    %v98 = vunpack.c.l.b16 %v34
    %v99 = vunpack.c.l.b16 %v35
    %v100 = vunpack.c.l.b16 %v36
    %v101 = vunpack.c.l.b16 %v37
    %v102 = vunpack.c.l.b16 %v38
    %v103 = vpack.c.b16 %v96, %v95
    %v104 = vpack.c.b16 %v98, %v97
    %v105 = vpack.c.b16 %v100, %v99
    %v106 = vpack.c.b16 %v102, %v101
    %vm107 = vcmask 97280
    %v109 = vsel %vm107, %v103, 0
    %v112 = vsel %vm107, %v104, 0
    %v115 = vsel %vm107, %v105, 0
    %v118 = vsel %vm107, %v106, 0
    %vm120 = vcmask 1045504
    %v122 = vsel %vm120, %v30, 0
    %124 = vmatprep.subr.bf16.mxu0 0
    %125 = vmatpush1.bf16.msra.mxu0 %v122
    %126 = vmatprep.subr.bf16.mxu0 0
    %127 = vmatpush1.bf16.msra.mxu0 0
    %128 = vmatprep.subr.bf16.mxu0 0
    %129 = vmatpush1.bf16.msra.mxu0 0
    %130 = vmatprep.subr.bf16.mxu0 0
    %131 = vmatpush1.bf16.msra.mxu0 0
    %132 = vmatprep.subr.bf16.mxu0 0
    %133 = vmatpush1.bf16.msra.mxu0 0
    %134 = vmatprep.subr.bf16.mxu0 0
    %135 = vmatpush1.bf16.msra.mxu0 0
    %136 = vmatprep.subr.bf16.mxu0 0
    %137 = vmatpush1.bf16.msra.mxu0 0
    %138 = vmatprep.subr.bf16.mxu0 0
    %139 = vmatpush1.bf16.msra.mxu0 0
    %140 = vmatprep.subr.bf16.mxu0 0
    %141 = vmatpush1.bf16.msra.mxu0 0
    %142 = vmatprep.subr.bf16.mxu0 0
    %143 = vmatpush1.bf16.msra.mxu0 0
    %144 = vmatprep.subr.bf16.mxu0 0
    %145 = vmatpush1.bf16.msra.mxu0 0
    %146 = vmatprep.subr.bf16.mxu0 0
    %147 = vmatpush1.bf16.msra.mxu0 0
    %148 = vmatprep.subr.bf16.mxu0 0
    %149 = vmatpush1.bf16.msra.mxu0 0
    %150 = vmatprep.subr.bf16.mxu0 0
    %151 = vmatpush1.bf16.msra.mxu0 0
    %152 = vmatprep.subr.bf16.mxu0 0
    %153 = vmatpush1.bf16.msra.mxu0 0
    %154 = vmatprep.subr.bf16.mxu0 0
    %155 = vmatpush1.bf16.msra.mxu0 0
    %156 = vmatprep.mubr.bf16.mxu0 0
    %157 = vmatmul.mubr.bf16.gmra.mrb[0].mxu0 %v109
    %v158 = vpop.f32.mrb[0].mxu0
    %v159 = vadd.f32 %v50, %v158
    %v160 = vpop.f32.mrb[0].mxu0
    %v161 = vpop.f32.mrb[0].mxu0
    %v162 = vadd.f32 %v55, %v161
    %v163 = vpop.f32.mrb[0].mxu0
    %164 = vmatprep.mubr.bf16.mxu0 0
    %165 = vmatmul.mubr.bf16.gmra.mrb[0].mxu0 %v112
    %v166 = vpop.f32.mrb[0].mxu0
    %v167 = vadd.f32 %v60, %v166
    %v168 = vpop.f32.mrb[0].mxu0
    %v169 = vpop.f32.mrb[0].mxu0
    %v170 = vadd.f32 %v65, %v169
    %v171 = vpop.f32.mrb[0].mxu0
    %172 = vmatprep.mubr.bf16.mxu0 0
    %173 = vmatmul.mubr.bf16.gmra.mrb[0].mxu0 %v115
    %v174 = vpop.f32.mrb[0].mxu0
    %v175 = vadd.f32 %v70, %v174
    %v176 = vpop.f32.mrb[0].mxu0
    %v177 = vpop.f32.mrb[0].mxu0
    %v178 = vadd.f32 %v75, %v177
    %v179 = vpop.f32.mrb[0].mxu0
    %180 = vmatprep.mubr.bf16.mxu0 0
    %181 = vmatmul.mubr.bf16.gmra.mrb[0].mxu0 %v118
    %v182 = vpop.f32.mrb[0].mxu0
    %v183 = vadd.f32 %v80, %v182
    %v184 = vpop.f32.mrb[0].mxu0
    %v185 = vpop.f32.mrb[0].mxu0
    %v186 = vadd.f32 %v85, %v185
    %v187 = vpop.f32.mrb[0].mxu0
    %188 = vdwg.mxu0
    %v189 = vmax.f32 %v159, 0.0
    %v190 = vmax.f32 %v162, 0.0
    %v191 = vmax.f32 %v167, 0.0
    %v192 = vmax.f32 %v170, 0.0
    %v193 = vmax.f32 %v175, 0.0
    %v194 = vmax.f32 %v178, 0.0
    %v195 = vmax.f32 %v183, 0.0
    %v196 = vmax.f32 %v186, 0.0
    %v197 = vld [vmem:[%s3] sm:$0xf]
    %v198 = vld [vmem:[%s3 + $0x4] sm:$0xf]
    %v199 = vld [vmem:[%s3 + $0x8] sm:$0xf]
    %v200 = vld [vmem:[%s3 + $0xc] sm:$0xf]
    %v201 = vld [vmem:[%s3 + $0x10] sm:$0xf]
    %v202 = vld [vmem:[%s3 + $0x14] sm:$0xf]
    %v203 = vld [vmem:[%s3 + $0x18] sm:$0xf]
    %v204 = vld [vmem:[%s3 + $0x1c] sm:$0xf]
    %v205 = vpack.c.bf16 %v190, %v189
    %v206 = vpack.c.bf16 %v192, %v191
    %v207 = vpack.c.bf16 %v194, %v193
    %v208 = vpack.c.bf16 %v196, %v195
    %v209 = vld [vmem:[%s4] sm:$0xff]
    %v210 = vld [vmem:[%s4 + $0x8] sm:$0xff]
    %v211 = vld [vmem:[%s4 + $0x10] sm:$0xff]
    %v212 = vld [vmem:[%s4 + $0x18] sm:$0xff]
    %v213 = vld [vmem:[%s4 + $0x20] sm:$0xff]
    %v214 = vld [vmem:[%s4 + $0x28] sm:$0xff]
    %v215 = vld [vmem:[%s4 + $0x30] sm:$0xff]
    %v216 = vld [vmem:[%s4 + $0x38] sm:$0xff]
    %218 = vset.pattern.permute.xlu0 0
    %219 = vperm.xlu0 %218, %v209
    %v220 = vpop.permute.xlu0 %219
    %223 = vset.pattern.permute.xlu0 0
    %224 = vperm.xlu0 %223, %v210
    %v225 = vpop.permute.xlu0 %224
    %228 = vset.pattern.permute.xlu0 0
    %229 = vperm.xlu0 %228, %v211
    %v230 = vpop.permute.xlu0 %229
    %233 = vset.pattern.permute.xlu0 0
    %234 = vperm.xlu0 %233, %v212
    %v235 = vpop.permute.xlu0 %234
    %238 = vset.pattern.permute.xlu0 0
    %239 = vperm.xlu0 %238, %v213
    %v240 = vpop.permute.xlu0 %239
    %243 = vset.pattern.permute.xlu0 0
    %244 = vperm.xlu0 %243, %v214
    %v245 = vpop.permute.xlu0 %244
    %248 = vset.pattern.permute.xlu0 0
    %249 = vperm.xlu0 %248, %v215
    %v250 = vpop.permute.xlu0 %249
    %253 = vset.pattern.permute.xlu0 0
    %254 = vperm.xlu0 %253, %v216
    %v255 = vpop.permute.xlu0 %254
    %v265 = vunpack.c.l.b16 %v197
    %v266 = vunpack.c.l.b16 %v198
    %v267 = vunpack.c.l.b16 %v199
    %v268 = vunpack.c.l.b16 %v200
    %v269 = vunpack.c.l.b16 %v201
    %v270 = vunpack.c.l.b16 %v202
    %v271 = vunpack.c.l.b16 %v203
    %v272 = vunpack.c.l.b16 %v204
    %v273 = vpack.c.b16 %v266, %v265
    %v274 = vpack.c.b16 %v268, %v267
    %v275 = vpack.c.b16 %v270, %v269
    %v276 = vpack.c.b16 %v272, %v271
    %vm277 = vcmask 523264
    %v279 = vsel %vm277, %v273, 0
    %v282 = vsel %vm277, %v274, 0
    %v285 = vsel %vm277, %v275, 0
    %v288 = vsel %vm277, %v276, 0
    %290 = vmatprep.subr.bf16.mxu0 0
    %291 = vmatpush1.bf16.msra.mxu0 %v205
    %292 = vmatprep.subr.bf16.mxu0 0
    %293 = vmatpush1.bf16.msra.mxu0 %v206
    %294 = vmatprep.subr.bf16.mxu0 0
    %295 = vmatpush1.bf16.msra.mxu0 %v207
    %296 = vmatprep.subr.bf16.mxu0 0
    %297 = vmatpush1.bf16.msra.mxu0 %v208
    %298 = vmatprep.subr.bf16.mxu0 0
    %299 = vmatpush1.bf16.msra.mxu0 0
    %300 = vmatprep.subr.bf16.mxu0 0
    %301 = vmatpush1.bf16.msra.mxu0 0
    %302 = vmatprep.subr.bf16.mxu0 0
    %303 = vmatpush1.bf16.msra.mxu0 0
    %304 = vmatprep.subr.bf16.mxu0 0
    %305 = vmatpush1.bf16.msra.mxu0 0
    %306 = vmatprep.subr.bf16.mxu0 0
    %307 = vmatpush1.bf16.msra.mxu0 0
    %308 = vmatprep.subr.bf16.mxu0 0
    %309 = vmatpush1.bf16.msra.mxu0 0
    %310 = vmatprep.subr.bf16.mxu0 0
    %311 = vmatpush1.bf16.msra.mxu0 0
    %312 = vmatprep.subr.bf16.mxu0 0
    %313 = vmatpush1.bf16.msra.mxu0 0
    %314 = vmatprep.subr.bf16.mxu0 0
    %315 = vmatpush1.bf16.msra.mxu0 0
    %316 = vmatprep.subr.bf16.mxu0 0
    %317 = vmatpush1.bf16.msra.mxu0 0
    %318 = vmatprep.subr.bf16.mxu0 0
    %319 = vmatpush1.bf16.msra.mxu0 0
    %320 = vmatprep.subr.bf16.mxu0 0
    %321 = vmatpush1.bf16.msra.mxu0 0
    %322 = vmatprep.mubr.bf16.mxu0 0
    %323 = vmatmul.mubr.bf16.gmra.mrb[0].mxu0 %v279
    %v324 = vpop.f32.mrb[0].mxu0
    %v325 = vadd.f32 %v220, %v324
    %v326 = vpop.f32.mrb[0].mxu0
    %v327 = vpop.f32.mrb[0].mxu0
    %v328 = vadd.f32 %v225, %v327
    %v329 = vpop.f32.mrb[0].mxu0
    %330 = vmatprep.mubr.bf16.mxu0 0
    %331 = vmatmul.mubr.bf16.gmra.mrb[0].mxu0 %v282
    %v332 = vpop.f32.mrb[0].mxu0
    %v333 = vadd.f32 %v230, %v332
    %v334 = vpop.f32.mrb[0].mxu0
    %v335 = vpop.f32.mrb[0].mxu0
    %v336 = vadd.f32 %v235, %v335
    %v337 = vpop.f32.mrb[0].mxu0
    %338 = vmatprep.mubr.bf16.mxu0 0
    %339 = vmatmul.mubr.bf16.gmra.mrb[0].mxu0 %v285
    %v340 = vpop.f32.mrb[0].mxu0
    %v341 = vadd.f32 %v240, %v340
    %v342 = vpop.f32.mrb[0].mxu0
    %v343 = vpop.f32.mrb[0].mxu0
    %v344 = vadd.f32 %v245, %v343
    %v345 = vpop.f32.mrb[0].mxu0
    %346 = vmatprep.mubr.bf16.mxu0 0
    %347 = vmatmul.mubr.bf16.gmra.mrb[0].mxu0 %v288
    %v348 = vpop.f32.mrb[0].mxu0
    %v349 = vadd.f32 %v250, %v348
    %v350 = vpop.f32.mrb[0].mxu0
    %v351 = vpop.f32.mrb[0].mxu0
    %v352 = vadd.f32 %v255, %v351
    %v353 = vpop.f32.mrb[0].mxu0
    %354 = vdwg.mxu0
    %v355 = vmax.f32 %v325, 0.0
    %v356 = vmax.f32 %v328, 0.0
    %v357 = vmax.f32 %v333, 0.0
    %v358 = vmax.f32 %v336, 0.0
    %v359 = vmax.f32 %v341, 0.0
    %v360 = vmax.f32 %v344, 0.0
    %v361 = vmax.f32 %v349, 0.0
    %v362 = vmax.f32 %v352, 0.0
    %v363 = vld [vmem:[%s5] sm:$0xf]
    %v364 = vld [vmem:[%s5 + $0x4] sm:$0x1]
    %v365 = vpack.c.bf16 %v356, %v355
    %v366 = vpack.c.bf16 %v358, %v357
    %v367 = vpack.c.bf16 %v360, %v359
    %v368 = vpack.c.bf16 %v362, %v361
    %v369 = vld [vmem:[%s6] sm:$0xff]
    %v370 = vld [vmem:[%s6 + $0x8] sm:$0x1]
    %372 = vset.pattern.permute.xlu0 0
    %373 = vperm.xlu0 %372, %v369
    %v374 = vpop.permute.xlu0 %373
    %377 = vset.pattern.permute.xlu0 0
    %378 = vperm.xlu0 %377, %v370
    %v379 = vpop.permute.xlu0 %378
    %v383 = vunpack.c.l.b16 %v363
    %v384 = vunpack.c.l.b16 %v364
    %v385 = vpack.c.b16 %v384, %v383
    %v387 = vsel %vm277, %v385, 0
    %389 = vmatprep.subr.bf16.mxu0 0
    %390 = vmatpush1.bf16.msra.mxu0 %v365
    %391 = vmatprep.subr.bf16.mxu0 0
    %392 = vmatpush1.bf16.msra.mxu0 %v366
    %393 = vmatprep.subr.bf16.mxu0 0
    %394 = vmatpush1.bf16.msra.mxu0 %v367
    %395 = vmatprep.subr.bf16.mxu0 0
    %396 = vmatpush1.bf16.msra.mxu0 %v368
    %397 = vmatprep.subr.bf16.mxu0 0
    %398 = vmatpush1.bf16.msra.mxu0 0
    %399 = vmatprep.subr.bf16.mxu0 0
    %400 = vmatpush1.bf16.msra.mxu0 0
    %401 = vmatprep.subr.bf16.mxu0 0
    %402 = vmatpush1.bf16.msra.mxu0 0
    %403 = vmatprep.subr.bf16.mxu0 0
    %404 = vmatpush1.bf16.msra.mxu0 0
    %405 = vmatprep.subr.bf16.mxu0 0
    %406 = vmatpush1.bf16.msra.mxu0 0
    %407 = vmatprep.subr.bf16.mxu0 0
    %408 = vmatpush1.bf16.msra.mxu0 0
    %409 = vmatprep.subr.bf16.mxu0 0
    %410 = vmatpush1.bf16.msra.mxu0 0
    %411 = vmatprep.subr.bf16.mxu0 0
    %412 = vmatpush1.bf16.msra.mxu0 0
    %413 = vmatprep.subr.bf16.mxu0 0
    %414 = vmatpush1.bf16.msra.mxu0 0
    %415 = vmatprep.subr.bf16.mxu0 0
    %416 = vmatpush1.bf16.msra.mxu0 0
    %417 = vmatprep.subr.bf16.mxu0 0
    %418 = vmatpush1.bf16.msra.mxu0 0
    %419 = vmatprep.subr.bf16.mxu0 0
    %420 = vmatpush1.bf16.msra.mxu0 0
    %421 = vmatprep.mubr.bf16.mxu0 0
    %422 = vmatmul.mubr.bf16.gmra.mrb[0].mxu0 %v387
    %v423 = vpop.f32.mrb[0].mxu0
    %v424 = vadd.f32 %v374, %v423
    %v425 = vpop.f32.mrb[0].mxu0
    %v426 = vpop.f32.mrb[0].mxu0
    %v427 = vadd.f32 %v379, %v426
    %v428 = vpop.f32.mrb[0].mxu0
    %429 = vdwg.mxu0
    %430 = vst [vmem:[#allocation2] sm:$0xff] %v424
    %431 = vst [vmem:[#allocation2 + $0x8] sm:$0x1] %v427
    // Predicated region
    $region30: #{tpu_custom_call.1} parent=1 // pred_check
      _
    $region31: #{tpu_custom_call.1} parent=1 // pred_check_branch
      %433 = sbr.rel (0) target = $region33
    $region32: #{tpu_custom_call.1} parent=1 // pred_region
      %s435 = ssub.s32 256, 256
      %436 = vsyncadd [#allocation3], %s435
      %s437 = sshll.u32 [#allocation2], 4
      %s438 = int_to_ptr.vmem [resolvable:$true] %s437
      %443 = dma.vmem_to_hbm [thread:$0]  %s438, 256, %s7, [#allocation3], 128, 128, 8
    $region33: #{tpu_custom_call.1} parent=1 // pred_fallthru
      _
    // Predicated region
    $region34: #{tpu_custom_call.1} parent=1 // pred_check
      _
    $region35: #{tpu_custom_call.1} parent=1 // pred_check_branch
      %445 = sbr.rel (0) target = $region37
    $region36: #{tpu_custom_call.1} parent=1 // pred_region
      %446 = dma.done [#allocation3], 256
    $region37: #{tpu_custom_call.1} parent=1 // pred_fallthru
      _
    %447 = vsyncpa [#allocation3], 1

</llo_original>
